<compile_context>
chip_gen: v6e
topology: v6e:2x2x1
jax: 0.10.0
libtpu: 0.0.40
codegen_flags: <defaults>
</compile_context>

<pallas_src>
import functools

import jax
import jax.numpy as jnp
from jax.experimental import pallas as pl
from jax.experimental.pallas import tpu as pltpu


def _erf(x):
    # Abramowitz & Stegun 7.1.26 (max abs err ~1.5e-7): exact-GELU erf built
    # only from exp / mul / where so it lowers cleanly in Mosaic.
    # TODO(synk): swap for jax.lax.erf once Mosaic exposes a native erf lowering;
    # pl.reciprocal(denom, approx=True) would move the divide to the EUP if the
    # accuracy budget allows.
    a1, a2, a3, a4, a5 = (0.254829592, -0.284496736, 1.421413741,
                          -1.453152027, 1.061405429)
    p = 0.3275911
    ax = jnp.abs(x)
    t = 1.0 / (1.0 + p * ax)
    poly = ((((a5 * t + a4) * t + a3) * t + a2) * t + a1) * t
    y = 1.0 - poly * jnp.exp(-ax * ax)
    return jnp.where(x < 0.0, -y, y)


def _fcu_down_kernel(x_ref, w_ref, b_ref, g_ref, beta_ref, o_ref, *, eps):
    # x_ref   : (1, TILE_N, Cin)  pooled tokens, channels-last
    # w_ref   : (Cin, Cout)       1x1-conv weight (as a channel matmul)
    # b_ref   : (1, Cout)         conv bias
    # g_ref   : (1, Cout)         LayerNorm gamma
    # beta_ref: (1, Cout)         LayerNorm beta
    # o_ref   : (1, TILE_N, Cout)
    cout = w_ref.shape[1]

    # Single MXU projection (pooling already applied in the wrapper).
    y = jnp.dot(x_ref[0], w_ref[...], preferred_element_type=jnp.float32)
    y = y + b_ref[...]                                       # (TILE_N, Cout)

    # LayerNorm over channels — fused statistics (one data pass, two reductions):
    #   var = E[y^2] - mu^2  (clamped at 0), eps inside rsqrt — PyTorch style.
    inv_c = jnp.float32(1.0 / cout)
    mu = jnp.sum(y, axis=-1, keepdims=True) * inv_c
    ms = jnp.sum(y * y, axis=-1, keepdims=True) * inv_c
    var = jnp.maximum(ms - mu * mu, 0.0)
    yn = (y - mu) * jax.lax.rsqrt(var + eps)
    yn = yn * g_ref[...] + beta_ref[...]

    # exact GELU (erf form, matches nn.GELU() default)
    out = 0.5 * yn * (1.0 + _erf(yn * jnp.float32(0.7071067811865476)))
    o_ref[0] = out.astype(o_ref.dtype)


def fcu_down(x, x_t, w, b, gamma, beta, dw_stride, eps=1e-6):
    """x: (B, Cin, H, W) NCHW; x_t: (B, T, Cout). Returns (B, 1 + N, Cout)."""
    B, Cin, H, W = x.shape
    Cout = w.shape[1]
    Hp, Wp = H // dw_stride, W // dw_stride
    N = Hp * Wp

    # Pool-then-project (exact): average over each dw x dw window on NCHW, then
    # transpose the (P x smaller) pooled tensor to tokens-major / channels-last.
    xp = x.reshape(B, Cin, Hp, dw_stride, Wp, dw_stride).mean(axis=(3, 5))
    xn = xp.reshape(B, Cin, N).transpose(0, 2, 1)            # (B, N, Cin)

    # Token tiling: bounded VMEM per step + extra parallel grid steps (megacore).
    TILE_N = min(N, 512)
    TILE_N = ((TILE_N + 7) // 8) * 8                         # sublane alignment
    num_n = -(-N // TILE_N)
    N_pad = num_n * TILE_N
    if N_pad != N:
        xn = jnp.pad(xn, ((0, 0), (0, N_pad - N), (0, 0)))   # zero rows, sliced off later

    kernel = functools.partial(_fcu_down_kernel, eps=eps)
    y = pl.pallas_call(
        kernel,
        out_shape=jax.ShapeDtypeStruct((B, N_pad, Cout), x.dtype),
        grid_spec=pltpu.PrefetchScalarGridSpec(
            num_scalar_prefetch=0,
            grid=(B, num_n),
            in_specs=[
                pl.BlockSpec((1, TILE_N, Cin), lambda bb, nn: (bb, nn, 0)),
                pl.BlockSpec((Cin, Cout), lambda bb, nn: (0, 0)),
                pl.BlockSpec((1, Cout), lambda bb, nn: (0, 0)),
                pl.BlockSpec((1, Cout), lambda bb, nn: (0, 0)),
                pl.BlockSpec((1, Cout), lambda bb, nn: (0, 0)),
            ],
            out_specs=pl.BlockSpec((1, TILE_N, Cout), lambda bb, nn: (bb, nn, 0)),
        ),
        compiler_params=pltpu.CompilerParams(
            dimension_semantics=("parallel", "parallel")),
    )(xn, w, b.reshape(1, Cout), gamma.reshape(1, Cout), beta.reshape(1, Cout))

    if N_pad != N:
        y = y[:, :N, :]

    cls_tok = x_t[:, :1, :]                                  # x_t[:, 0][:, None, :]
    return jnp.concatenate([cls_tok, y], axis=1)


def fcu_down_reference(x, x_t, w, b, gamma, beta, dw_stride, eps=1e-6):
    """Pure-JAX reference mirroring the PyTorch module, for a sanity check."""
    B, Cin, H, W = x.shape
    Hp, Wp = H // dw_stride, W // dw_stride
    y = jnp.einsum('bchw,cd->bdhw', x, w) + b[None, :, None, None]
    y = y.reshape(B, -1, Hp, dw_stride, Wp, dw_stride).mean(axis=(3, 5))
    y = y.reshape(B, -1, Hp * Wp).transpose(0, 2, 1)         # (B, N, Cout)
    mu = y.mean(-1, keepdims=True)
    var = jnp.mean((y - mu) ** 2, -1, keepdims=True)
    y = (y - mu) / jnp.sqrt(var + eps) * gamma + beta
    y = 0.5 * y * (1.0 + jax.lax.erf(y / jnp.sqrt(2.0)))
    return jnp.concatenate([x_t[:, :1, :], y], axis=1)


if __name__ == "__main__":
    # Small shapes consistent with the module's forward.
    B, inplanes, H, W = 2, 4, 16, 16
    outplanes, dw_stride = 32, 2
    T = 8                                                    # x_t sequence length

    key = jax.random.PRNGKey(0)
    k_x, k_xt, k_w, k_b, k_g, k_beta = jax.random.split(key, 6)

    x = jax.random.normal(k_x, (B, inplanes, H, W), jnp.float32)
    x_t = jax.random.normal(k_xt, (B, T, outplanes), jnp.float32)

    # Deterministic synthetic parameters.
    # conv_project weight (Cout, Cin, 1, 1) stored directly as (Cin, Cout).
    w = 0.2 * jax.random.normal(k_w, (inplanes, outplanes), jnp.float32)
    b = 0.1 * jax.random.normal(k_b, (outplanes,), jnp.float32)
    gamma = 1.0 + 0.1 * jax.random.normal(k_g, (outplanes,), jnp.float32)
    beta = 0.1 * jax.random.normal(k_beta, (outplanes,), jnp.float32)

    out = fcu_down(x, x_t, w, b, gamma, beta, dw_stride)
    out = jax.block_until_ready(out)

    ref = fcu_down_reference(x, x_t, w, b, gamma, beta, dw_stride)
    assert out.shape == (B, 1 + (H // dw_stride) * (W // dw_stride), outplanes)
    assert jnp.allclose(out, ref, rtol=1e-5, atol=1e-5), (
        float(jnp.max(jnp.abs(out - ref))))
    print("KERNEL_OK")
</pallas_src>

<mosaic_0001>
module attributes {stable_mosaic.version = 11 : i64} {
  func.func @_fcu_down_kernel(%arg0: i32, %arg1: i32, %arg2: memref<1x64x4xf32, #tpu.memory_space<vmem>>, %arg3: memref<4x32xf32, #tpu.memory_space<vmem>>, %arg4: memref<1x32xf32, #tpu.memory_space<vmem>>, %arg5: memref<1x32xf32, #tpu.memory_space<vmem>>, %arg6: memref<1x32xf32, #tpu.memory_space<vmem>>, %arg7: memref<1x64x32xf32, #tpu.memory_space<vmem>>) attributes {dimension_semantics = [#tpu.dimension_semantics<parallel>, #tpu.dimension_semantics<parallel>], iteration_bounds = array<i64: 2, 1>, scalar_prefetch = 0 : i64, scratch_operands = 0 : i64, tpu.core_type = #tpu.core_type<tc>, window_params = [{transform_indices = @transform_0, window_bounds = array<i64: 1, 64, 4>}, {pipeline_mode = #tpu.pipeline_mode<synchronous>, transform_indices = @transform_1, window_bounds = array<i64: 4, 32>}, {pipeline_mode = #tpu.pipeline_mode<synchronous>, transform_indices = @transform_2, window_bounds = array<i64: 1, 32>}, {pipeline_mode = #tpu.pipeline_mode<synchronous>, transform_indices = @transform_3, window_bounds = array<i64: 1, 32>}, {pipeline_mode = #tpu.pipeline_mode<synchronous>, transform_indices = @transform_4, window_bounds = array<i64: 1, 32>}, {transform_indices = @transform_5, window_bounds = array<i64: 1, 64, 32>}]} {
    %c0 = arith.constant 0 : index
    %c0_0 = arith.constant 0 : index
    %c0_1 = arith.constant 0 : index
    %0 = vector.load %arg2[%c0, %c0_0, %c0_1] : memref<1x64x4xf32, #tpu.memory_space<vmem>>, vector<1x64x4xf32>
    %1 = vector.shape_cast %0 : vector<1x64x4xf32> to vector<64x4xf32>
    %c0_2 = arith.constant 0 : index
    %c0_3 = arith.constant 0 : index
    %2 = vector.load %arg3[%c0_2, %c0_3] : memref<4x32xf32, #tpu.memory_space<vmem>>, vector<4x32xf32>
    %cst = arith.constant dense<0.000000e+00> : vector<64x32xf32>
    %3 = tpu.matmul %1, %2, %cst {dimension_numbers = #tpu.dot_dimension_numbers<[1], [0], [0], [1], [0, 0, 1, 1], [], []>} : vector<64x4xf32>, vector<4x32xf32>, vector<64x32xf32> -> vector<64x32xf32>
    %c0_4 = arith.constant 0 : index
    %c0_5 = arith.constant 0 : index
    %4 = vector.load %arg4[%c0_4, %c0_5] : memref<1x32xf32, #tpu.memory_space<vmem>>, vector<1x32xf32>
    %5 = vector.broadcast %4 : vector<1x32xf32> to vector<64x32xf32>
    %6 = arith.addf %3, %5 : vector<64x32xf32>
    %cst_6 = arith.constant dense<0.000000e+00> : vector<64xf32>
    %7 = vector.multi_reduction <add>, %6, %cst_6 [1] : vector<64x32xf32> to vector<64xf32>
    %8 = vector.shape_cast %7 : vector<64xf32> to vector<64x1xf32>
    %cst_7 = arith.constant 3.125000e-02 : f32
    %9 = vector.broadcast %cst_7 : f32 to vector<64x1xf32>
    %10 = arith.mulf %8, %9 : vector<64x1xf32>
    %11 = arith.mulf %6, %6 : vector<64x32xf32>
    %cst_8 = arith.constant dense<0.000000e+00> : vector<64xf32>
    %12 = vector.multi_reduction <add>, %11, %cst_8 [1] : vector<64x32xf32> to vector<64xf32>
    %13 = vector.shape_cast %12 : vector<64xf32> to vector<64x1xf32>
    %cst_9 = arith.constant 3.125000e-02 : f32
    %14 = vector.broadcast %cst_9 : f32 to vector<64x1xf32>
    %15 = arith.mulf %13, %14 : vector<64x1xf32>
    %16 = arith.mulf %10, %10 : vector<64x1xf32>
    %17 = arith.subf %15, %16 : vector<64x1xf32>
    %cst_10 = arith.constant 0.000000e+00 : f32
    %18 = vector.broadcast %cst_10 : f32 to vector<64x1xf32>
    %19 = arith.maximumf %17, %18 : vector<64x1xf32>
    %20 = vector.broadcast %10 : vector<64x1xf32> to vector<64x32xf32>
    %21 = arith.subf %6, %20 : vector<64x32xf32>
    %cst_11 = arith.constant 9.99999997E-7 : f32
    %22 = vector.broadcast %cst_11 : f32 to vector<64x1xf32>
    %23 = arith.addf %19, %22 : vector<64x1xf32>
    %24 = math.rsqrt %23 : vector<64x1xf32>
    %25 = vector.broadcast %24 : vector<64x1xf32> to vector<64x32xf32>
    %26 = arith.mulf %21, %25 : vector<64x32xf32>
    %c0_12 = arith.constant 0 : index
    %c0_13 = arith.constant 0 : index
    %27 = vector.load %arg5[%c0_12, %c0_13] : memref<1x32xf32, #tpu.memory_space<vmem>>, vector<1x32xf32>
    %28 = vector.broadcast %27 : vector<1x32xf32> to vector<64x32xf32>
    %29 = arith.mulf %26, %28 : vector<64x32xf32>
    %c0_14 = arith.constant 0 : index
    %c0_15 = arith.constant 0 : index
    %30 = vector.load %arg6[%c0_14, %c0_15] : memref<1x32xf32, #tpu.memory_space<vmem>>, vector<1x32xf32>
    %31 = vector.broadcast %30 : vector<1x32xf32> to vector<64x32xf32>
    %32 = arith.addf %29, %31 : vector<64x32xf32>
    %cst_16 = arith.constant 5.000000e-01 : f32
    %33 = vector.broadcast %cst_16 : f32 to vector<64x32xf32>
    %34 = arith.mulf %33, %32 : vector<64x32xf32>
    %cst_17 = arith.constant 0.707106769 : f32
    %35 = vector.broadcast %cst_17 : f32 to vector<64x32xf32>
    %36 = arith.mulf %32, %35 : vector<64x32xf32>
    %37 = math.absf %36 : vector<64x32xf32>
    %cst_18 = arith.constant 0.327591091 : f32
    %38 = vector.broadcast %cst_18 : f32 to vector<64x32xf32>
    %39 = arith.mulf %38, %37 : vector<64x32xf32>
    %cst_19 = arith.constant 1.000000e+00 : f32
    %40 = vector.broadcast %cst_19 : f32 to vector<64x32xf32>
    %41 = arith.addf %40, %39 : vector<64x32xf32>
    %cst_20 = arith.constant 1.000000e+00 : f32
    %42 = vector.broadcast %cst_20 : f32 to vector<64x32xf32>
    %43 = arith.divf %42, %41 : vector<64x32xf32>
    %cst_21 = arith.constant 1.06140542 : f32
    %44 = vector.broadcast %cst_21 : f32 to vector<64x32xf32>
    %45 = arith.mulf %44, %43 : vector<64x32xf32>
    %cst_22 = arith.constant -1.45315206 : f32
    %46 = vector.broadcast %cst_22 : f32 to vector<64x32xf32>
    %47 = arith.addf %45, %46 : vector<64x32xf32>
    %48 = arith.mulf %47, %43 : vector<64x32xf32>
    %cst_23 = arith.constant 1.42141378 : f32
    %49 = vector.broadcast %cst_23 : f32 to vector<64x32xf32>
    %50 = arith.addf %48, %49 : vector<64x32xf32>
    %51 = arith.mulf %50, %43 : vector<64x32xf32>
    %cst_24 = arith.constant -0.284496725 : f32
    %52 = vector.broadcast %cst_24 : f32 to vector<64x32xf32>
    %53 = arith.addf %51, %52 : vector<64x32xf32>
    %54 = arith.mulf %53, %43 : vector<64x32xf32>
    %cst_25 = arith.constant 0.254829586 : f32
    %55 = vector.broadcast %cst_25 : f32 to vector<64x32xf32>
    %56 = arith.addf %54, %55 : vector<64x32xf32>
    %57 = arith.mulf %56, %43 : vector<64x32xf32>
    %cst_26 = arith.constant 0.000000e+00 : f32
    %58 = vector.broadcast %cst_26 : f32 to vector<64x32xf32>
    %59 = arith.subf %58, %37 : vector<64x32xf32>
    %60 = arith.mulf %59, %37 : vector<64x32xf32>
    %61 = math.exp %60 : vector<64x32xf32>
    %62 = arith.mulf %57, %61 : vector<64x32xf32>
    %cst_27 = arith.constant 1.000000e+00 : f32
    %63 = vector.broadcast %cst_27 : f32 to vector<64x32xf32>
    %64 = arith.subf %63, %62 : vector<64x32xf32>
    %cst_28 = arith.constant 0.000000e+00 : f32
    %65 = vector.broadcast %cst_28 : f32 to vector<64x32xf32>
    %66 = arith.cmpf olt, %36, %65 : vector<64x32xf32>
    %cst_29 = arith.constant 0.000000e+00 : f32
    %67 = vector.broadcast %cst_29 : f32 to vector<64x32xf32>
    %68 = arith.subf %67, %64 : vector<64x32xf32>
    %69 = arith.select %66, %68, %64 : vector<64x32xi1>, vector<64x32xf32>
    %cst_30 = arith.constant 1.000000e+00 : f32
    %70 = vector.broadcast %cst_30 : f32 to vector<64x32xf32>
    %71 = arith.addf %70, %69 : vector<64x32xf32>
    %72 = arith.mulf %34, %71 : vector<64x32xf32>
    %c0_31 = arith.constant 0 : index
    %c0_32 = arith.constant 0 : index
    %c0_33 = arith.constant 0 : index
    %73 = vector.load %arg7[%c0_31, %c0_32, %c0_33] : memref<1x64x32xf32, #tpu.memory_space<vmem>>, vector<1x64x32xf32>
    %74 = vector.shape_cast %73 : vector<1x64x32xf32> to vector<64x32xf32>
    %75 = vector.shape_cast %72 : vector<64x32xf32> to vector<1x64x32xf32>
    tpu.vector_store %arg7[%c0_31, %c0_32, %c0_33], %75 {strides = array<i32>} : memref<1x64x32xf32, #tpu.memory_space<vmem>>, vector<1x64x32xf32>,
    return
  }
  func.func @transform_0(%arg0: i32, %arg1: i32) -> (i32, i32, i32) {
    %c0_i32 = arith.constant 0 : i32
    %c0_i32_0 = arith.constant 0 : i32
    return %arg0, %arg1, %c0_i32 : i32, i32, i32
  }
  func.func @transform_1(%arg0: i32, %arg1: i32) -> (i32, i32) {
    %c0_i32 = arith.constant 0 : i32
    %c0_i32_0 = arith.constant 0 : i32
    %c0_i32_1 = arith.constant 0 : i32
    return %c0_i32, %c0_i32_0 : i32, i32
  }
  func.func @transform_2(%arg0: i32, %arg1: i32) -> (i32, i32) {
    %c0_i32 = arith.constant 0 : i32
    %c0_i32_0 = arith.constant 0 : i32
    %c0_i32_1 = arith.constant 0 : i32
    return %c0_i32, %c0_i32_0 : i32, i32
  }
  func.func @transform_3(%arg0: i32, %arg1: i32) -> (i32, i32) {
    %c0_i32 = arith.constant 0 : i32
    %c0_i32_0 = arith.constant 0 : i32
    %c0_i32_1 = arith.constant 0 : i32
    return %c0_i32, %c0_i32_0 : i32, i32
  }
  func.func @transform_4(%arg0: i32, %arg1: i32) -> (i32, i32) {
    %c0_i32 = arith.constant 0 : i32
    %c0_i32_0 = arith.constant 0 : i32
    %c0_i32_1 = arith.constant 0 : i32
    return %c0_i32, %c0_i32_0 : i32, i32
  }
  func.func @transform_5(%arg0: i32, %arg1: i32) -> (i32, i32, i32) {
    %c0_i32 = arith.constant 0 : i32
    %c0_i32_0 = arith.constant 0 : i32
    return %arg0, %arg1, %c0_i32 : i32, i32, i32
  }
}

</mosaic_0001>

<llo_original>
// kernel: tpu_custom_call.1
$region0: #{tpu_custom_call.1}
  #allocation0 [shape = 'u32[]', space=smem, size = 0x4, offset = 0x4, fixed_abs, tag = 'smem constant byte address 0x4 - core index']
  #allocation1 [shape = 'u32[144,128]{1,0:T(1,128)}', space=vmem, size = 0x12000, scoped, tag = 'internal scratch']
  %s0 = inlined_call_operand.vmem [shape: f32[2,64,4], index: 0, kind: input, shape index: {}]
  %s1 = inlined_call_operand.vmem [shape: f32[4,32], index: 1, kind: input, shape index: {}]
  %s2 = inlined_call_operand.vmem [shape: f32[1,32], index: 2, kind: input, shape index: {}]
  %s3 = inlined_call_operand.vmem [shape: f32[1,32], index: 3, kind: input, shape index: {}]
  %s4 = inlined_call_operand.vmem [shape: f32[1,32], index: 4, kind: input, shape index: {}]
  %s5 = inlined_call_operand.vmem [shape: f32[2,64,32], index: 5, kind: output, shape index: {}]
  %s6 = sld [smem:[#allocation0]]
  $region53: #{tpu_custom_call.1} parent=0
    _
  %s8 = ssub.s32 1, %s6
  %s9 = scalar_select 0, %s8, %s6
  loop: start=0, step=1, limit=4
  $region2: #{tpu_custom_call.1} parent=0 // loop_pre_header
    _
  $region3: #{tpu_custom_call.1} parent=0 // loop_header
    %s11 = sphi 0, %s15
    %p12 = scmp.ge.s32.totalorder %s11, 4
    %s18 = sphi 0, %s30
    %s19 = sphi 0, %s26
    %s20 = sphi 0, %s18
    %s21 = sphi 0, %s19
    %s22 = sphi 0, %s20
    %s23 = sphi 0, %s21
    %s35 = sphi 0, %s37
    %s38 = sphi 0, %s35
    %s39 = sphi 0, %s38
    %s55 = sphi 0, %s39
    %s59 = sphi 0, %s59
    %s61 = sphi 0, %s59
    %s62 = sphi 0, %s61
    %s76 = sphi 0, %s62
    %s80 = sphi 0, %s80
    %s82 = sphi 0, %s80
    %s83 = sphi 0, %s82
    %s97 = sphi 0, %s83
    %s101 = sphi 0, %s101
    %s103 = sphi 0, %s101
    %s104 = sphi 0, %s103
    %s118 = sphi 0, %s104
    %s122 = sphi 0, %s122
    %s124 = sphi 0, %s122
    %s125 = sphi 0, %s124
    %s139 = sphi 0, %s125
    %s147 = sphi 0, %s149
    %s150 = sphi 0, %s147
    %s151 = sphi 0, %s150
    %s167 = sphi 0, %s151
  $region4: #{tpu_custom_call.1} parent=0 // loop_header_branch
    %14 = sbr.rel (%p12) target = $region8
  $region5: #{tpu_custom_call.1} parent=0 // loop_body
    %s16 = ssub.s32 %s11, 1
    %s17 = ssub.s32 %s11, 2
    %s24 = sadd.s32 1, %s19
    %p25 = scmp.ge.s32.totalorder %s24, 1
    %s26 = scalar_select %p25, 0, %s24
    %s27 = sadd.s32 1, %s18
    %s28 = scalar_select %p25, %s27, %s18
    %p29 = scmp.ge.s32.totalorder %s28, 2
    %s30 = scalar_select %p29, 0, %s28
    %s31 = ssub.s32 %s18, %s30
    %s32 = ssub.s32 %s19, %s26
    %s33 = sor.u32 %s31, %s32
    %p34 = scmp.eq.s32.totalorder %s33, 0
    %s36 = sadd.s32 %s35, 1
    %s37 = scalar_select %p34, %s35, %s36
    %p40 = pneg %p34
    %p41 = scmp.eq.s32.totalorder %s11, 1
    %p42 = por %p40, %p41
    %p43 = scmp.ne.s32.totalorder %s35, %s38
    %p44 = scmp.eq.s32.totalorder %s11, 0
    %p45 = por %p43, %p44
    %p46 = scmp.ne.s32.totalorder %s35, %s38
    %p47 = scmp.eq.s32.totalorder %s16, 1
    %p48 = por %p46, %p47
    %p49 = scmp.ne.s32.totalorder %s38, %s39
    %p50 = scmp.eq.s32.totalorder %s16, 0
    %p51 = por %p49, %p50
    %p52 = scmp.ne.s32.totalorder %s38, %s39
    %p53 = scmp.eq.s32.totalorder %s17, 1
    %p54 = por %p52, %p53
    %p56 = scmp.ne.s32.totalorder %s39, %s55
    %p57 = scmp.eq.s32.totalorder %s17, 0
    %p58 = por %p56, %p57
    %s60 = sadd.s32 %s59, 1
    %p63 = scmp.eq.s32.totalorder %s11, 1
    %p64 = scmp.ne.s32.totalorder %s59, %s61
    %p65 = scmp.eq.s32.totalorder %s11, 0
    %p66 = por %p64, %p65
    %p67 = scmp.ne.s32.totalorder %s59, %s61
    %p68 = scmp.eq.s32.totalorder %s16, 1
    %p69 = por %p67, %p68
    %p70 = scmp.ne.s32.totalorder %s61, %s62
    %p71 = scmp.eq.s32.totalorder %s16, 0
    %p72 = por %p70, %p71
    %p73 = scmp.ne.s32.totalorder %s61, %s62
    %p74 = scmp.eq.s32.totalorder %s17, 1
    %p75 = por %p73, %p74
    %p77 = scmp.ne.s32.totalorder %s62, %s76
    %p78 = scmp.eq.s32.totalorder %s17, 0
    %p79 = por %p77, %p78
    %s81 = sadd.s32 %s80, 1
    %p84 = scmp.eq.s32.totalorder %s11, 1
    %p85 = scmp.ne.s32.totalorder %s80, %s82
    %p86 = scmp.eq.s32.totalorder %s11, 0
    %p87 = por %p85, %p86
    %p88 = scmp.ne.s32.totalorder %s80, %s82
    %p89 = scmp.eq.s32.totalorder %s16, 1
    %p90 = por %p88, %p89
    %p91 = scmp.ne.s32.totalorder %s82, %s83
    %p92 = scmp.eq.s32.totalorder %s16, 0
    %p93 = por %p91, %p92
    %p94 = scmp.ne.s32.totalorder %s82, %s83
    %p95 = scmp.eq.s32.totalorder %s17, 1
    %p96 = por %p94, %p95
    %p98 = scmp.ne.s32.totalorder %s83, %s97
    %p99 = scmp.eq.s32.totalorder %s17, 0
    %p100 = por %p98, %p99
    %s102 = sadd.s32 %s101, 1
    %p105 = scmp.eq.s32.totalorder %s11, 1
    %p106 = scmp.ne.s32.totalorder %s101, %s103
    %p107 = scmp.eq.s32.totalorder %s11, 0
    %p108 = por %p106, %p107
    %p109 = scmp.ne.s32.totalorder %s101, %s103
    %p110 = scmp.eq.s32.totalorder %s16, 1
    %p111 = por %p109, %p110
    %p112 = scmp.ne.s32.totalorder %s103, %s104
    %p113 = scmp.eq.s32.totalorder %s16, 0
    %p114 = por %p112, %p113
    %p115 = scmp.ne.s32.totalorder %s103, %s104
    %p116 = scmp.eq.s32.totalorder %s17, 1
    %p117 = por %p115, %p116
    %p119 = scmp.ne.s32.totalorder %s104, %s118
    %p120 = scmp.eq.s32.totalorder %s17, 0
    %p121 = por %p119, %p120
    %s123 = sadd.s32 %s122, 1
    %p126 = scmp.eq.s32.totalorder %s11, 1
    %p127 = scmp.ne.s32.totalorder %s122, %s124
    %p128 = scmp.eq.s32.totalorder %s11, 0
    %p129 = por %p127, %p128
    %p130 = scmp.ne.s32.totalorder %s122, %s124
    %p131 = scmp.eq.s32.totalorder %s16, 1
    %p132 = por %p130, %p131
    %p133 = scmp.ne.s32.totalorder %s124, %s125
    %p134 = scmp.eq.s32.totalorder %s16, 0
    %p135 = por %p133, %p134
    %p136 = scmp.ne.s32.totalorder %s124, %s125
    %p137 = scmp.eq.s32.totalorder %s17, 1
    %p138 = por %p136, %p137
    %p140 = scmp.ne.s32.totalorder %s125, %s139
    %p141 = scmp.eq.s32.totalorder %s17, 0
    %p142 = por %p140, %p141
    %s143 = ssub.s32 %s18, %s30
    %s144 = ssub.s32 %s19, %s26
    %s145 = sor.u32 %s143, %s144
    %p146 = scmp.eq.s32.totalorder %s145, 0
    %s148 = sadd.s32 %s147, 1
    %s149 = scalar_select %p146, %s147, %s148
    %p152 = pneg %p146
    %p153 = scmp.eq.s32.totalorder %s11, 1
    %p154 = por %p152, %p153
    %p155 = scmp.ne.s32.totalorder %s147, %s150
    %p156 = scmp.eq.s32.totalorder %s11, 0
    %p157 = por %p155, %p156
    %p158 = scmp.ne.s32.totalorder %s147, %s150
    %p159 = scmp.eq.s32.totalorder %s16, 1
    %p160 = por %p158, %p159
    %p161 = scmp.ne.s32.totalorder %s150, %s151
    %p162 = scmp.eq.s32.totalorder %s16, 0
    %p163 = por %p161, %p162
    %p164 = scmp.ne.s32.totalorder %s150, %s151
    %p165 = scmp.eq.s32.totalorder %s17, 1
    %p166 = por %p164, %p165
    %p168 = scmp.ne.s32.totalorder %s151, %s167
    %p169 = scmp.eq.s32.totalorder %s17, 0
    %p170 = por %p168, %p169
    %p171 = scmp.le.s32.totalorder 1, %s11
    %p172 = scmp.lt.s32.totalorder %s11, 3
    %p173 = pnand %p171, %p172
    %p174 = pneg %p173
    // Predicated region
    $region9: #{tpu_custom_call.1} parent=5 // pred_check
      _
    $region10: #{tpu_custom_call.1} parent=5 // pred_check_branch
      %176 = sbr.rel (%p173) target = $region12
    $region11: #{tpu_custom_call.1} parent=5 // pred_region
      %s177 = ssub.s32 %s11, 1
      // Predicated region
      $region13: #{tpu_custom_call.1} parent=11 // pred_check
        %p178 = pneg %p72
      $region14: #{tpu_custom_call.1} parent=11 // pred_check_branch
        %180 = sbr.rel (%p178) target = $region16
      $region15: #{tpu_custom_call.1} parent=11 // pred_region
        _
      $region16: #{tpu_custom_call.1} parent=11 // pred_fallthru
        _
      // Predicated region
      $region17: #{tpu_custom_call.1} parent=11 // pred_check
        %p181 = pneg %p93
      $region18: #{tpu_custom_call.1} parent=11 // pred_check_branch
        %183 = sbr.rel (%p181) target = $region20
      $region19: #{tpu_custom_call.1} parent=11 // pred_region
        _
      $region20: #{tpu_custom_call.1} parent=11 // pred_fallthru
        _
      // Predicated region
      $region21: #{tpu_custom_call.1} parent=11 // pred_check
        %p184 = pneg %p114
      $region22: #{tpu_custom_call.1} parent=11 // pred_check_branch
        %186 = sbr.rel (%p184) target = $region24
      $region23: #{tpu_custom_call.1} parent=11 // pred_region
        _
      $region24: #{tpu_custom_call.1} parent=11 // pred_fallthru
        _
      // Predicated region
      $region25: #{tpu_custom_call.1} parent=11 // pred_check
        %p187 = pneg %p135
      $region26: #{tpu_custom_call.1} parent=11 // pred_check_branch
        %189 = sbr.rel (%p187) target = $region28
      $region27: #{tpu_custom_call.1} parent=11 // pred_region
        _
      $region28: #{tpu_custom_call.1} parent=11 // pred_fallthru
        _
    $region12: #{tpu_custom_call.1} parent=5 // pred_fallthru
      _
    %p190 = scmp.lt.s32.totalorder %s11, 2
    // Predicated region
    $region29: #{tpu_custom_call.1} parent=5 // pred_check
      %p191 = pneg %p190
    $region30: #{tpu_custom_call.1} parent=5 // pred_check_branch
      %193 = sbr.rel (%p191) target = $region32
    $region31: #{tpu_custom_call.1} parent=5 // pred_region
      // Predicated region
      $region33: #{tpu_custom_call.1} parent=31 // pred_check
        %p194 = pneg %p45
      $region34: #{tpu_custom_call.1} parent=31 // pred_check_branch
        %196 = sbr.rel (%p194) target = $region36
      $region35: #{tpu_custom_call.1} parent=31 // pred_region
        %s197 = smul.u32 8, %s19
        %p198 = scmp.lt.s32.totalorder %s18, 1
        %s199 = scalar_select %p198, %s18, 1
        %p200 = scmp.lt.s32.totalorder %s197, 7
        %s201 = scalar_select %p200, %s197, 7
        %s202 = smul.addr %s199, 8
        %s203 = sadd.s32 %s201, %s202
        %s204 = smul.addr %s203, 8
        %s205 = scalar_lea.vmem %s0, %s204
        %s206 = smul.u32 8, %s19
      $region36: #{tpu_custom_call.1} parent=31 // pred_fallthru
        _
    $region32: #{tpu_custom_call.1} parent=5 // pred_fallthru
      _
    %p207 = scmp.le.s32.totalorder 1, %s11
    %p208 = scmp.lt.s32.totalorder %s11, 3
    %p209 = pnand %p207, %p208
    %p210 = pneg %p209
    // Predicated region
    $region37: #{tpu_custom_call.1} parent=5 // pred_check
      _
    $region38: #{tpu_custom_call.1} parent=5 // pred_check_branch
      %212 = sbr.rel (%p209) target = $region40
    $region39: #{tpu_custom_call.1} parent=5 // pred_region
      %s213 = ssub.s32 %s11, 1
      %s214 = smul.u32 8, %s21
      %p215 = scmp.lt.s32.totalorder %s20, 1
      %s216 = scalar_select %p215, %s20, 1
      %p217 = scmp.lt.s32.totalorder %s214, 7
      %s218 = scalar_select %p217, %s214, 7
      %s219 = smul.addr %s216, 8
      %s220 = sadd.s32 %s218, %s219
      %s221 = smul.addr %s220, 8
      %s222 = scalar_lea.vmem %s0, %s221
      %p223 = pneg %p51
      %p224 = pneg %p48
      %p225 = pneg %p72
      %p226 = pneg %p69
      %p227 = pneg %p93
      %p228 = pneg %p90
      %p229 = pneg %p114
      %p230 = pneg %p111
      %p231 = pneg %p135
      %p232 = pneg %p132
      %p233 = pneg %p163
      %p234 = pneg %p160
      %s235 = smul.u32 8, %s21
      %p236 = scmp.lt.s32.totalorder %s20, 1
      %s237 = scalar_select %p236, %s20, 1
      %p238 = scmp.lt.s32.totalorder %s235, 7
      %s239 = scalar_select %p238, %s235, 7
      %s240 = smul.addr %s237, 8
      %s241 = sadd.s32 %s239, %s240
      %s242 = smul.addr %s241, 8
      %s243 = scalar_lea.vmem %s5, %s242
      %s244 = smul.u32 8, %s21
      %p245 = scmp.lt.s32.totalorder %s20, 1
      %s246 = scalar_select %p245, %s20, 1
      %p247 = scmp.lt.s32.totalorder %s244, 7
      %s248 = scalar_select %p247, %s244, 7
      %s249 = smul.addr %s246, 8
      %s250 = sadd.s32 %s248, %s249
      %s251 = smul.addr %s250, 8
      %s252 = scalar_lea.vmem %s0, %s251
      %s253 = smul.u32 8, %s21
      %s254 = smul.u32 8, %s21
      %p255 = scmp.lt.s32.totalorder %s20, 1
      %s256 = scalar_select %p255, %s20, 1
      %p257 = scmp.lt.s32.totalorder %s254, 7
      %s258 = scalar_select %p257, %s254, 7
      %s259 = smul.addr %s256, 8
      %s260 = sadd.s32 %s258, %s259
      %s261 = smul.addr %s260, 8
      %s262 = scalar_lea.vmem %s5, %s261
      %s263 = smul.u32 8, %s21
      %v264 = vld [vmem:[%s252] sm:$0xff]
      %v265 = vld [vmem:[%s252 + $0x8] sm:$0xff]
      %v266 = vld [vmem:[%s252 + $0x10] sm:$0xff]
      %v267 = vld [vmem:[%s252 + $0x18] sm:$0xff]
      %v268 = vld [vmem:[%s252 + $0x20] sm:$0xff]
      %v269 = vld [vmem:[%s252 + $0x28] sm:$0xff]
      %v270 = vld [vmem:[%s252 + $0x30] sm:$0xff]
      %v271 = vld [vmem:[%s252 + $0x38] sm:$0xff]
      %v272 = vld [vmem:[%s1] sm:$0xf]
      %v273 = vld [vmem:[%s2] sm:$0x1]
      %v275 = vlaneseq
      %v276 = vshrl.u32 %v275, 7
      %v277 = vsub.s32 0, %v276
      %v278 = vrot.slane %v273, %v277
      %vm280 = vcmask 31744
      %v282 = vsel %vm280, %v264, 0
      %v285 = vsel %vm280, %v265, 0
      %v288 = vsel %vm280, %v266, 0
      %v291 = vsel %vm280, %v267, 0
      %v294 = vsel %vm280, %v268, 0
      %v297 = vsel %vm280, %v269, 0
      %v300 = vsel %vm280, %v270, 0
      %v303 = vsel %vm280, %v271, 0
      %vm305 = vcmask 1043456
      %v307 = vsel %vm305, %v272, 0
      %309 = vmatprep.subr.mxu0 0.0
      %310 = vmatpush1.msra.mxu0 0.0
      %311 = vmatprep.subr.mxu0 0.0
      %312 = vmatpush1.msra.mxu0 0.0
      %313 = vmatprep.subr.mxu0 0.0
      %314 = vmatpush1.msra.mxu0 0.0
      %315 = vmatprep.subr.mxu0 0.0
      %316 = vmatpush1.msra.mxu0 0.0
      %317 = vmatprep.subr.mxu0 0.0
      %318 = vmatpush1.msra.mxu0 0.0
      %319 = vmatprep.subr.mxu0 0.0
      %320 = vmatpush1.msra.mxu0 0.0
      %321 = vmatprep.subr.mxu0 0.0
      %322 = vmatpush1.msra.mxu0 0.0
      %323 = vmatprep.subr.mxu0 0.0
      %324 = vmatpush1.msra.mxu0 0.0
      %325 = vmatprep.subr.mxu0 0.0
      %326 = vmatpush1.msra.mxu0 0.0
      %327 = vmatprep.subr.mxu0 0.0
      %328 = vmatpush1.msra.mxu0 0.0
      %329 = vmatprep.subr.mxu0 0.0
      %330 = vmatpush1.msra.mxu0 0.0
      %331 = vmatprep.subr.mxu0 0.0
      %332 = vmatpush1.msra.mxu0 0.0
      %333 = vmatprep.subr.mxu0 0.0
      %334 = vmatpush1.msra.mxu0 0.0
      %335 = vmatprep.subr.mxu0 0.0
      %336 = vmatpush1.msra.mxu0 0.0
      %337 = vmatprep.subr.mxu0 0.0
      %338 = vmatpush1.msra.mxu0 0.0
      %339 = vmatprep.subr.mxu0 0.0
      %340 = vmatpush1.msra.mxu0 %v307
      %341 = vmatprep.subr.mxu0 0.0
      %342 = vmatpush2.msra.mxu0 0.0
      %343 = vmatprep.subr.mxu0 0.0
      %344 = vmatpush2.msra.mxu0 0.0
      %345 = vmatprep.subr.mxu0 0.0
      %346 = vmatpush2.msra.mxu0 0.0
      %347 = vmatprep.subr.mxu0 0.0
      %348 = vmatpush2.msra.mxu0 0.0
      %349 = vmatprep.subr.mxu0 0.0
      %350 = vmatpush2.msra.mxu0 0.0
      %351 = vmatprep.subr.mxu0 0.0
      %352 = vmatpush2.msra.mxu0 0.0
      %353 = vmatprep.subr.mxu0 0.0
      %354 = vmatpush2.msra.mxu0 0.0
      %355 = vmatprep.subr.mxu0 0.0
      %356 = vmatpush2.msra.mxu0 0.0
      %357 = vmatprep.subr.mxu0 0.0
      %358 = vmatpush2.msra.mxu0 0.0
      %359 = vmatprep.subr.mxu0 0.0
      %360 = vmatpush2.msra.mxu0 0.0
      %361 = vmatprep.subr.mxu0 0.0
      %362 = vmatpush2.msra.mxu0 0.0
      %363 = vmatprep.subr.mxu0 0.0
      %364 = vmatpush2.msra.mxu0 0.0
      %365 = vmatprep.subr.mxu0 0.0
      %366 = vmatpush2.msra.mxu0 0.0
      %367 = vmatprep.subr.mxu0 0.0
      %368 = vmatpush2.msra.mxu0 0.0
      %369 = vmatprep.subr.mxu0 0.0
      %370 = vmatpush2.msra.mxu0 0.0
      %371 = vmatprep.subr.mxu0 0.0
      %372 = vmatpush2.msra.mxu0 0.0
      %373 = vmatprep.mubr.f32.mxu0 0.0
      %374 = vmatmul.mubr.f32.gmra.mxu0 %v282
      %v375 = vpop.f32.mrf.mxu0
      %v376 = vadd.f32 %v278, %v375
      %v377 = vpop.f32.mrf.mxu0
      %378 = vmatprep.mubr.f32.mxu0 0.0
      %379 = vmatmul.mubr.f32.gmra.mxu0 %v285
      %v380 = vpop.f32.mrf.mxu0
      %v381 = vadd.f32 %v278, %v380
      %v382 = vpop.f32.mrf.mxu0
      %383 = vmatprep.mubr.f32.mxu0 0.0
      %384 = vmatmul.mubr.f32.gmra.mxu0 %v288
      %v385 = vpop.f32.mrf.mxu0
      %v386 = vadd.f32 %v278, %v385
      %v387 = vpop.f32.mrf.mxu0
      %388 = vmatprep.mubr.f32.mxu0 0.0
      %389 = vmatmul.mubr.f32.gmra.mxu0 %v291
      %v390 = vpop.f32.mrf.mxu0
      %v391 = vadd.f32 %v278, %v390
      %v392 = vpop.f32.mrf.mxu0
      %393 = vmatprep.mubr.f32.mxu0 0.0
      %394 = vmatmul.mubr.f32.gmra.mxu0 %v294
      %v395 = vpop.f32.mrf.mxu0
      %v396 = vadd.f32 %v278, %v395
      %v397 = vpop.f32.mrf.mxu0
      %398 = vmatprep.mubr.f32.mxu0 0.0
      %399 = vmatmul.mubr.f32.gmra.mxu0 %v297
      %v400 = vpop.f32.mrf.mxu0
      %v401 = vadd.f32 %v278, %v400
      %v402 = vpop.f32.mrf.mxu0
      %403 = vmatprep.mubr.f32.mxu0 0.0
      %404 = vmatmul.mubr.f32.gmra.mxu0 %v300
      %v405 = vpop.f32.mrf.mxu0
      %v406 = vadd.f32 %v278, %v405
      %v407 = vpop.f32.mrf.mxu0
      %408 = vmatprep.mubr.f32.mxu0 0.0
      %409 = vmatmul.mubr.f32.gmra.mxu0 %v303
      %v410 = vpop.f32.mrf.mxu0
      %v411 = vadd.f32 %v278, %v410
      %v412 = vpop.f32.mrf.mxu0
      %413 = vdwg.mxu0
      %vm414 = vcmask 261120
      %v415 = vsel %vm414, %v376, 0.0
      %416 = vadd.xlane.f32.xlu0 %v415
      %v417 = vpop.xlane.xlu0 %416
      %v418 = vsel %vm414, %v381, 0.0
      %419 = vadd.xlane.f32.xlu0 %v418
      %v420 = vpop.xlane.xlu0 %419
      %v421 = vsel %vm414, %v386, 0.0
      %422 = vadd.xlane.f32.xlu0 %v421
      %v423 = vpop.xlane.xlu0 %422
      %v424 = vsel %vm414, %v391, 0.0
      %425 = vadd.xlane.f32.xlu0 %v424
      %v426 = vpop.xlane.xlu0 %425
      %v427 = vsel %vm414, %v396, 0.0
      %428 = vadd.xlane.f32.xlu0 %v427
      %v429 = vpop.xlane.xlu0 %428
      %v430 = vsel %vm414, %v401, 0.0
      %431 = vadd.xlane.f32.xlu0 %v430
      %v432 = vpop.xlane.xlu0 %431
      %v433 = vsel %vm414, %v406, 0.0
      %434 = vadd.xlane.f32.xlu0 %v433
      %v435 = vpop.xlane.xlu0 %434
      %v436 = vsel %vm414, %v411, 0.0
      %437 = vadd.xlane.f32.xlu0 %v436
      %v438 = vpop.xlane.xlu0 %437
      %v439 = vmul.f32 %v417, 0.03125
      %v440 = vmul.f32 %v420, 0.03125
      %v441 = vmul.f32 %v423, 0.03125
      %v442 = vmul.f32 %v426, 0.03125
      %v443 = vmul.f32 %v429, 0.03125
      %v444 = vmul.f32 %v432, 0.03125
      %v445 = vmul.f32 %v435, 0.03125
      %v446 = vmul.f32 %v438, 0.03125
      %v447 = vmul.f32 %v376, %v376
      %v448 = vmul.f32 %v381, %v381
      %v449 = vmul.f32 %v386, %v386
      %v450 = vmul.f32 %v391, %v391
      %v451 = vmul.f32 %v396, %v396
      %v452 = vmul.f32 %v401, %v401
      %v453 = vmul.f32 %v406, %v406
      %v454 = vmul.f32 %v411, %v411
      %v455 = vsel %vm414, %v447, 0.0
      %456 = vadd.xlane.f32.xlu0 %v455
      %v457 = vpop.xlane.xlu0 %456
      %v458 = vsel %vm414, %v448, 0.0
      %459 = vadd.xlane.f32.xlu0 %v458
      %v460 = vpop.xlane.xlu0 %459
      %v461 = vsel %vm414, %v449, 0.0
      %462 = vadd.xlane.f32.xlu0 %v461
      %v463 = vpop.xlane.xlu0 %462
      %v464 = vsel %vm414, %v450, 0.0
      %465 = vadd.xlane.f32.xlu0 %v464
      %v466 = vpop.xlane.xlu0 %465
      %v467 = vsel %vm414, %v451, 0.0
      %468 = vadd.xlane.f32.xlu0 %v467
      %v469 = vpop.xlane.xlu0 %468
      %v470 = vsel %vm414, %v452, 0.0
      %471 = vadd.xlane.f32.xlu0 %v470
      %v472 = vpop.xlane.xlu0 %471
      %v473 = vsel %vm414, %v453, 0.0
      %474 = vadd.xlane.f32.xlu0 %v473
      %v475 = vpop.xlane.xlu0 %474
      %v476 = vsel %vm414, %v454, 0.0
      %477 = vadd.xlane.f32.xlu0 %v476
      %v478 = vpop.xlane.xlu0 %477
      %v479 = vmul.f32 %v457, 0.03125
      %v480 = vmul.f32 %v460, 0.03125
      %v481 = vmul.f32 %v463, 0.03125
      %v482 = vmul.f32 %v466, 0.03125
      %v483 = vmul.f32 %v469, 0.03125
      %v484 = vmul.f32 %v472, 0.03125
      %v485 = vmul.f32 %v475, 0.03125
      %v486 = vmul.f32 %v478, 0.03125
      %v487 = vmul.f32 %v439, %v439
      %v488 = vmul.f32 %v440, %v440
      %v489 = vmul.f32 %v441, %v441
      %v490 = vmul.f32 %v442, %v442
      %v491 = vmul.f32 %v443, %v443
      %v492 = vmul.f32 %v444, %v444
      %v493 = vmul.f32 %v445, %v445
      %v494 = vmul.f32 %v446, %v446
      %v495 = vsub.f32 %v479, %v487
      %v496 = vsub.f32 %v480, %v488
      %v497 = vsub.f32 %v481, %v489
      %v498 = vsub.f32 %v482, %v490
      %v499 = vsub.f32 %v483, %v491
      %v500 = vsub.f32 %v484, %v492
      %v501 = vsub.f32 %v485, %v493
      %v502 = vsub.f32 %v486, %v494
      %v503 = vmax.f32 %v495, 0.0
      %v504 = vmax.f32 %v496, 0.0
      %v505 = vmax.f32 %v497, 0.0
      %v506 = vmax.f32 %v498, 0.0
      %v507 = vmax.f32 %v499, 0.0
      %v508 = vmax.f32 %v500, 0.0
      %v509 = vmax.f32 %v501, 0.0
      %v510 = vmax.f32 %v502, 0.0
      %v511 = vsub.f32 %v376, %v439
      %v512 = vsub.f32 %v381, %v440
      %v513 = vsub.f32 %v386, %v441
      %v514 = vsub.f32 %v391, %v442
      %v515 = vsub.f32 %v396, %v443
      %v516 = vsub.f32 %v401, %v444
      %v517 = vsub.f32 %v406, %v445
      %v518 = vsub.f32 %v411, %v446
      %v519 = vadd.f32 %v503, 1e-06
      %v520 = vadd.f32 %v504, 1e-06
      %v521 = vadd.f32 %v505, 1e-06
      %v522 = vadd.f32 %v506, 1e-06
      %v523 = vadd.f32 %v507, 1e-06
      %v524 = vadd.f32 %v508, 1e-06
      %v525 = vadd.f32 %v509, 1e-06
      %v526 = vadd.f32 %v510, 1e-06
      %v527 = vrsqrt.pop %v519
      %v528 = vrsqrt.pop %v520
      %v529 = vrsqrt.pop %v521
      %v530 = vrsqrt.pop %v522
      %v531 = vrsqrt.pop %v523
      %v532 = vrsqrt.pop %v524
      %v533 = vrsqrt.pop %v525
      %v534 = vrsqrt.pop %v526
      %v535 = vmul.f32 %v511, %v527
      %v536 = vmul.f32 %v512, %v528
      %v537 = vmul.f32 %v513, %v529
      %v538 = vmul.f32 %v514, %v530
      %v539 = vmul.f32 %v515, %v531
      %v540 = vmul.f32 %v516, %v532
      %v541 = vmul.f32 %v517, %v533
      %v542 = vmul.f32 %v518, %v534
      %v543 = vld [vmem:[%s3] sm:$0x1]
      %v545 = vlaneseq
      %v546 = vshrl.u32 %v545, 7
      %v547 = vsub.s32 0, %v546
      %v548 = vrot.slane %v543, %v547
      %v550 = vmul.f32 %v535, %v548
      %v551 = vmul.f32 %v536, %v548
      %v552 = vmul.f32 %v537, %v548
      %v553 = vmul.f32 %v538, %v548
      %v554 = vmul.f32 %v539, %v548
      %v555 = vmul.f32 %v540, %v548
      %v556 = vmul.f32 %v541, %v548
      %v557 = vmul.f32 %v542, %v548
      %v558 = vld [vmem:[%s4] sm:$0x1]
      %v560 = vlaneseq
      %v561 = vshrl.u32 %v560, 7
      %v562 = vsub.s32 0, %v561
      %v563 = vrot.slane %v558, %v562
      %v565 = vadd.f32 %v550, %v563
      %v566 = vadd.f32 %v551, %v563
      %v567 = vadd.f32 %v552, %v563
      %v568 = vadd.f32 %v553, %v563
      %v569 = vadd.f32 %v554, %v563
      %v570 = vadd.f32 %v555, %v563
      %v571 = vadd.f32 %v556, %v563
      %v572 = vadd.f32 %v557, %v563
      %v573 = vmul.f32 %v565, 0.5
      %v574 = vmul.f32 %v566, 0.5
      %v575 = vmul.f32 %v567, 0.5
      %v576 = vmul.f32 %v568, 0.5
      %v577 = vmul.f32 %v569, 0.5
      %v578 = vmul.f32 %v570, 0.5
      %v579 = vmul.f32 %v571, 0.5
      %v580 = vmul.f32 %v572, 0.5
      %v581 = vmul.f32 %v565, 0.70710677
      %v582 = vmul.f32 %v566, 0.70710677
      %v583 = vmul.f32 %v567, 0.70710677
      %v584 = vmul.f32 %v568, 0.70710677
      %v585 = vmul.f32 %v569, 0.70710677
      %v586 = vmul.f32 %v570, 0.70710677
      %v587 = vmul.f32 %v571, 0.70710677
      %v588 = vmul.f32 %v572, 0.70710677
      %v589 = vand.u32 2147483647, %v581
      %v590 = vand.u32 2147483647, %v582
      %v591 = vand.u32 2147483647, %v583
      %v592 = vand.u32 2147483647, %v584
      %v593 = vand.u32 2147483647, %v585
      %v594 = vand.u32 2147483647, %v586
      %v595 = vand.u32 2147483647, %v587
      %v596 = vand.u32 2147483647, %v588
      %v597 = vmul.f32 %v589, 0.3275911
      %v598 = vmul.f32 %v590, 0.3275911
      %v599 = vmul.f32 %v591, 0.3275911
      %v600 = vmul.f32 %v592, 0.3275911
      %v601 = vmul.f32 %v593, 0.3275911
      %v602 = vmul.f32 %v594, 0.3275911
      %v603 = vmul.f32 %v595, 0.3275911
      %v604 = vmul.f32 %v596, 0.3275911
      %v605 = vadd.f32 %v597, 1.0
      %v606 = vadd.f32 %v598, 1.0
      %v607 = vadd.f32 %v599, 1.0
      %v608 = vadd.f32 %v600, 1.0
      %v609 = vadd.f32 %v601, 1.0
      %v610 = vadd.f32 %v602, 1.0
      %v611 = vadd.f32 %v603, 1.0
      %v612 = vadd.f32 %v604, 1.0
      %v613 = vrcp.pop %v605
      %v614 = vmul.f32 1.0, %v613
      %v615 = vrcp.pop %v606
      %v616 = vmul.f32 1.0, %v615
      %v617 = vrcp.pop %v607
      %v618 = vmul.f32 1.0, %v617
      %v619 = vrcp.pop %v608
      %v620 = vmul.f32 1.0, %v619
      %v621 = vrcp.pop %v609
      %v622 = vmul.f32 1.0, %v621
      %v623 = vrcp.pop %v610
      %v624 = vmul.f32 1.0, %v623
      %v625 = vrcp.pop %v611
      %v626 = vmul.f32 1.0, %v625
      %v627 = vrcp.pop %v612
      %v628 = vmul.f32 1.0, %v627
      %v629 = vmul.f32 %v614, 1.0614054
      %v630 = vmul.f32 %v616, 1.0614054
      %v631 = vmul.f32 %v618, 1.0614054
      %v632 = vmul.f32 %v620, 1.0614054
      %v633 = vmul.f32 %v622, 1.0614054
      %v634 = vmul.f32 %v624, 1.0614054
      %v635 = vmul.f32 %v626, 1.0614054
      %v636 = vmul.f32 %v628, 1.0614054
      %v637 = vadd.f32 %v629, -1.4531521
      %v638 = vadd.f32 %v630, -1.4531521
      %v639 = vadd.f32 %v631, -1.4531521
      %v640 = vadd.f32 %v632, -1.4531521
      %v641 = vadd.f32 %v633, -1.4531521
      %v642 = vadd.f32 %v634, -1.4531521
      %v643 = vadd.f32 %v635, -1.4531521
      %v644 = vadd.f32 %v636, -1.4531521
      %v645 = vmul.f32 %v637, %v614
      %v646 = vmul.f32 %v638, %v616
      %v647 = vmul.f32 %v639, %v618
      %v648 = vmul.f32 %v640, %v620
      %v649 = vmul.f32 %v641, %v622
      %v650 = vmul.f32 %v642, %v624
      %v651 = vmul.f32 %v643, %v626
      %v652 = vmul.f32 %v644, %v628
      %v653 = vadd.f32 %v645, 1.4214138
      %v654 = vadd.f32 %v646, 1.4214138
      %v655 = vadd.f32 %v647, 1.4214138
      %v656 = vadd.f32 %v648, 1.4214138
      %v657 = vadd.f32 %v649, 1.4214138
      %v658 = vadd.f32 %v650, 1.4214138
      %v659 = vadd.f32 %v651, 1.4214138
      %v660 = vadd.f32 %v652, 1.4214138
      %v661 = vmul.f32 %v653, %v614
      %v662 = vmul.f32 %v654, %v616
      %v663 = vmul.f32 %v655, %v618
      %v664 = vmul.f32 %v656, %v620
      %v665 = vmul.f32 %v657, %v622
      %v666 = vmul.f32 %v658, %v624
      %v667 = vmul.f32 %v659, %v626
      %v668 = vmul.f32 %v660, %v628
      %v669 = vadd.f32 %v661, -0.28449672
      %v670 = vadd.f32 %v662, -0.28449672
      %v671 = vadd.f32 %v663, -0.28449672
      %v672 = vadd.f32 %v664, -0.28449672
      %v673 = vadd.f32 %v665, -0.28449672
      %v674 = vadd.f32 %v666, -0.28449672
      %v675 = vadd.f32 %v667, -0.28449672
      %v676 = vadd.f32 %v668, -0.28449672
      %v677 = vmul.f32 %v669, %v614
      %v678 = vmul.f32 %v670, %v616
      %v679 = vmul.f32 %v671, %v618
      %v680 = vmul.f32 %v672, %v620
      %v681 = vmul.f32 %v673, %v622
      %v682 = vmul.f32 %v674, %v624
      %v683 = vmul.f32 %v675, %v626
      %v684 = vmul.f32 %v676, %v628
      %v685 = vadd.f32 %v677, 0.2548296
      %v686 = vadd.f32 %v678, 0.2548296
      %v687 = vadd.f32 %v679, 0.2548296
      %v688 = vadd.f32 %v680, 0.2548296
      %v689 = vadd.f32 %v681, 0.2548296
      %v690 = vadd.f32 %v682, 0.2548296
      %v691 = vadd.f32 %v683, 0.2548296
      %v692 = vadd.f32 %v684, 0.2548296
      %v693 = vmul.f32 %v685, %v614
      %v694 = vmul.f32 %v686, %v616
      %v695 = vmul.f32 %v687, %v618
      %v696 = vmul.f32 %v688, %v620
      %v697 = vmul.f32 %v689, %v622
      %v698 = vmul.f32 %v690, %v624
      %v699 = vmul.f32 %v691, %v626
      %v700 = vmul.f32 %v692, %v628
      %v701 = vsub.f32 0.0, %v589
      %v702 = vsub.f32 0.0, %v590
      %v703 = vsub.f32 0.0, %v591
      %v704 = vsub.f32 0.0, %v592
      %v705 = vsub.f32 0.0, %v593
      %v706 = vsub.f32 0.0, %v594
      %v707 = vsub.f32 0.0, %v595
      %v708 = vsub.f32 0.0, %v596
      %v709 = vmul.f32 %v701, %v589
      %v710 = vmul.f32 %v702, %v590
      %v711 = vmul.f32 %v703, %v591
      %v712 = vmul.f32 %v704, %v592
      %v713 = vmul.f32 %v705, %v593
      %v714 = vmul.f32 %v706, %v594
      %v715 = vmul.f32 %v707, %v595
      %v716 = vmul.f32 %v708, %v596
      %v717 = vmul.f32 %v709, 1.442695
      %v718 = vpow.pop %v717
      %v719 = vmul.f32 %v710, 1.442695
      %v720 = vpow.pop %v719
      %v721 = vmul.f32 %v711, 1.442695
      %v722 = vpow.pop %v721
      %v723 = vmul.f32 %v712, 1.442695
      %v724 = vpow.pop %v723
      %v725 = vmul.f32 %v713, 1.442695
      %v726 = vpow.pop %v725
      %v727 = vmul.f32 %v714, 1.442695
      %v728 = vpow.pop %v727
      %v729 = vmul.f32 %v715, 1.442695
      %v730 = vpow.pop %v729
      %v731 = vmul.f32 %v716, 1.442695
      %v732 = vpow.pop %v731
      %v733 = vmul.f32 %v693, %v718
      %v734 = vmul.f32 %v694, %v720
      %v735 = vmul.f32 %v695, %v722
      %v736 = vmul.f32 %v696, %v724
      %v737 = vmul.f32 %v697, %v726
      %v738 = vmul.f32 %v698, %v728
      %v739 = vmul.f32 %v699, %v730
      %v740 = vmul.f32 %v700, %v732
      %v741 = vsub.f32 1.0, %v733
      %v742 = vsub.f32 1.0, %v734
      %v743 = vsub.f32 1.0, %v735
      %v744 = vsub.f32 1.0, %v736
      %v745 = vsub.f32 1.0, %v737
      %v746 = vsub.f32 1.0, %v738
      %v747 = vsub.f32 1.0, %v739
      %v748 = vsub.f32 1.0, %v740
      %vm749 = vcmp.lt.f32.partialorder %v581, 0.0
      %vm750 = vcmp.lt.f32.partialorder %v582, 0.0
      %vm751 = vcmp.lt.f32.partialorder %v583, 0.0
      %vm752 = vcmp.lt.f32.partialorder %v584, 0.0
      %vm753 = vcmp.lt.f32.partialorder %v585, 0.0
      %vm754 = vcmp.lt.f32.partialorder %v586, 0.0
      %vm755 = vcmp.lt.f32.partialorder %v587, 0.0
      %vm756 = vcmp.lt.f32.partialorder %v588, 0.0
      %v757 = vsub.f32 0.0, %v741
      %v758 = vsub.f32 0.0, %v742
      %v759 = vsub.f32 0.0, %v743
      %v760 = vsub.f32 0.0, %v744
      %v761 = vsub.f32 0.0, %v745
      %v762 = vsub.f32 0.0, %v746
      %v763 = vsub.f32 0.0, %v747
      %v764 = vsub.f32 0.0, %v748
      %v765 = vsel %vm749, %v757, %v741
      %v766 = vsel %vm750, %v758, %v742
      %v767 = vsel %vm751, %v759, %v743
      %v768 = vsel %vm752, %v760, %v744
      %v769 = vsel %vm753, %v761, %v745
      %v770 = vsel %vm754, %v762, %v746
      %v771 = vsel %vm755, %v763, %v747
      %v772 = vsel %vm756, %v764, %v748
      %v773 = vadd.f32 %v765, 1.0
      %v774 = vadd.f32 %v766, 1.0
      %v775 = vadd.f32 %v767, 1.0
      %v776 = vadd.f32 %v768, 1.0
      %v777 = vadd.f32 %v769, 1.0
      %v778 = vadd.f32 %v770, 1.0
      %v779 = vadd.f32 %v771, 1.0
      %v780 = vadd.f32 %v772, 1.0
      %v781 = vmul.f32 %v573, %v773
      %v782 = vmul.f32 %v574, %v774
      %v783 = vmul.f32 %v575, %v775
      %v784 = vmul.f32 %v576, %v776
      %v785 = vmul.f32 %v577, %v777
      %v786 = vmul.f32 %v578, %v778
      %v787 = vmul.f32 %v579, %v779
      %v788 = vmul.f32 %v580, %v780
      %789 = vst.msk [vmem:[%s262] sm:$0xff] %vm414, %v781
      %790 = vst.msk [vmem:[%s262 + $0x8] sm:$0xff] %vm414, %v782
      %791 = vst.msk [vmem:[%s262 + $0x10] sm:$0xff] %vm414, %v783
      %792 = vst.msk [vmem:[%s262 + $0x18] sm:$0xff] %vm414, %v784
      %793 = vst.msk [vmem:[%s262 + $0x20] sm:$0xff] %vm414, %v785
      %794 = vst.msk [vmem:[%s262 + $0x28] sm:$0xff] %vm414, %v786
      %795 = vst.msk [vmem:[%s262 + $0x30] sm:$0xff] %vm414, %v787
      %796 = vst.msk [vmem:[%s262 + $0x38] sm:$0xff] %vm414, %v788
      %s797 = smul.u32 8, %s21
      %p798 = scmp.lt.s32.totalorder %s20, 1
      %s799 = scalar_select %p798, %s20, 1
      %p800 = scmp.lt.s32.totalorder %s797, 7
      %s801 = scalar_select %p800, %s797, 7
      %s802 = smul.addr %s799, 8
      %s803 = sadd.s32 %s801, %s802
      %s804 = smul.addr %s803, 8
      %s805 = scalar_lea.vmem %s5, %s804
      // Predicated region
      $region41: #{tpu_custom_call.1} parent=39 // pred_check
        %p806 = pneg %p160
      $region42: #{tpu_custom_call.1} parent=39 // pred_check_branch
        %808 = sbr.rel (%p806) target = $region44
      $region43: #{tpu_custom_call.1} parent=39 // pred_region
        %s809 = smul.u32 8, %s21
      $region44: #{tpu_custom_call.1} parent=39 // pred_fallthru
        _
    $region40: #{tpu_custom_call.1} parent=5 // pred_fallthru
      _
    %p810 = scmp.le.s32.totalorder 2, %s11
    // Predicated region
    $region45: #{tpu_custom_call.1} parent=5 // pred_check
      %p811 = pneg %p810
    $region46: #{tpu_custom_call.1} parent=5 // pred_check_branch
      %813 = sbr.rel (%p811) target = $region48
    $region47: #{tpu_custom_call.1} parent=5 // pred_region
      %s814 = ssub.s32 %s11, 2
      // Predicated region
      $region49: #{tpu_custom_call.1} parent=47 // pred_check
        %p815 = pneg %p166
      $region50: #{tpu_custom_call.1} parent=47 // pred_check_branch
        %817 = sbr.rel (%p815) target = $region52
      $region51: #{tpu_custom_call.1} parent=47 // pred_region
        %s818 = smul.u32 8, %s23
        %p819 = scmp.lt.s32.totalorder %s22, 1
        %s820 = scalar_select %p819, %s22, 1
        %p821 = scmp.lt.s32.totalorder %s818, 7
        %s822 = scalar_select %p821, %s818, 7
        %s823 = smul.addr %s820, 8
        %s824 = sadd.s32 %s822, %s823
        %s825 = smul.addr %s824, 8
        %s826 = scalar_lea.vmem %s5, %s825
      $region52: #{tpu_custom_call.1} parent=47 // pred_fallthru
        _
    $region48: #{tpu_custom_call.1} parent=5 // pred_fallthru
      _
  $region6: #{tpu_custom_call.1} parent=0 // loop_footer
    %s15 = sadd.s32 1, %s11
  $region7: #{tpu_custom_call.1} parent=0 // loop_footer_branch
    %10 = sbr.rel target = $region3
  $region8: #{tpu_custom_call.1} parent=0 // loop_exit
    _

</llo_original>
